<compile_context>
chip_gen: v7x
topology: tpu7x:2x2x1
jax: 0.10.0
libtpu: 0.0.40
codegen_flags: <defaults>
</compile_context>

<pallas_src>
import jax
import jax.numpy as jnp
from jax.experimental import pallas as pl
from jax.experimental.pallas import tpu as pltpu

IN_FEATURES = 784   # 28*28, fixed by nn.Linear(784, 150)
HIDDEN = 150
OUT = 10


# --------------------------- Pallas kernel -----------------------------------

def _netfull_kernel(x_ref, w1_ref, b1_ref, w2_ref, b2_ref, o_ref):
    # x_ref : [tm, 784] bf16   w1_ref: [784, 150] bf16   b1_ref: [1, 150] f32
    # w2_ref: [150, 10] f32    b2_ref: [1, 10]    f32    o_ref : [tm, 10] f32
    # fc1 on the MXU in bf16 with f32 accumulation (dominant FLOPs + DMA).
    h = jnp.dot(x_ref[...], w1_ref[...], preferred_element_type=jnp.float32)
    h = jnp.tanh(h + b1_ref[...])                       # f32 elementwise (EUP)
    # fc2 (tiny) kept in f32.
    y = jnp.dot(h, w2_ref[...], preferred_element_type=jnp.float32) + b2_ref[...]
    # Numerically stable log_softmax over the 10 classes.
    m = jnp.max(y, axis=-1, keepdims=True)
    s = y - m
    lse = jnp.log(jnp.sum(jnp.exp(s), axis=-1, keepdims=True))
    o_ref[...] = (s - lse).astype(o_ref.dtype)


# --------------------------- pallas_call wrapper ------------------------------

def _choose_tm(m):
    # Tiny batches: one block equal to the full batch dim (allowed since the
    # block then equals the array dim; no 8-row padding needed).
    if m <= 8:
        return m
    # Otherwise: largest tile that still leaves >= 2 grid blocks, so per-step
    # overhead is amortized AND v7x's two TensorCores both get work.
    for tm in (2048, 1024, 512, 256, 128, 64, 32, 16, 8):
        if m >= 2 * tm:
            return tm
    return 8


def netfull_forward(x, params):
    """x: [B, ...] flattening to 784 features/example -> [B, 10] log-probs."""
    b = x.shape[0]
    # Flatten + cast to bf16 OUTSIDE the kernel (XLA fuses it into the
    # reshape/producer); halves the dominant HBM input stream. fc1 rounds x to
    # bf16 anyway, so numerics match the previous f32-fed version.
    xf = x.reshape(b, -1).astype(jnp.bfloat16)   # torch's input.view(B, -1)
    assert xf.shape[1] == IN_FEATURES, xf.shape

    tm = _choose_tm(b)
    grid = (pl.cdiv(b, tm),)   # ragged tail masked by Pallas; no jnp.pad

    cost = pl.CostEstimate(
        flops=2 * b * (IN_FEATURES * HIDDEN + HIDDEN * OUT),
        transcendentals=b * (HIDDEN + OUT),          # tanh + exp
        bytes_accessed=(b * IN_FEATURES * 2          # x (bf16)
                        + b * OUT * 4                # output (f32)
                        + IN_FEATURES * HIDDEN * 2   # w1 (bf16), fetched once
                        + HIDDEN * OUT * 4           # w2 (f32)
                        + HIDDEN * 4 + OUT * 4),     # biases
    )

    out = pl.pallas_call(
        _netfull_kernel,
        out_shape=jax.ShapeDtypeStruct((b, OUT), jnp.float32),
        grid=grid,
        in_specs=[
            pl.BlockSpec((tm, IN_FEATURES), lambda i: (i, 0)),
            # Constant block index -> DMA'd once, VMEM-resident across steps.
            pl.BlockSpec((IN_FEATURES, HIDDEN), lambda i: (0, 0)),
            pl.BlockSpec((1, HIDDEN), lambda i: (0, 0)),
            pl.BlockSpec((HIDDEN, OUT), lambda i: (0, 0)),
            pl.BlockSpec((1, OUT), lambda i: (0, 0)),
        ],
        # Keep the output lane-narrow (tm, 10); padding to 128 lanes would add
        # HBM write bytes on a memory-bound kernel.
        out_specs=pl.BlockSpec((tm, OUT), lambda i: (i, 0)),
        compiler_params=pltpu.CompilerParams(
            dimension_semantics=("parallel",)),   # megacore-shard batch blocks
        cost_estimate=cost,
    )(xf, params["w1"], params["b1"], params["w2"], params["b2"])
    return out


# --------------------------- params -------------------------------------------

def init_params(key):
    # PyTorch default nn.Linear init: U(-1/sqrt(fan_in), +1/sqrt(fan_in)).
    # Weights are prepared ONCE, already transposed to [in, out]; W1 is stored
    # in bf16 for the MXU (halves its HBM/DMA cost), biases/W2 stay f32.
    ks = jax.random.split(key, 4)

    def u(k, shape, fan_in):
        bound = 1.0 / (fan_in ** 0.5)
        return jax.random.uniform(k, shape, jnp.float32, -bound, bound)

    w1 = u(ks[0], (IN_FEATURES, HIDDEN), IN_FEATURES)
    b1 = u(ks[1], (1, HIDDEN), IN_FEATURES)
    w2 = u(ks[2], (HIDDEN, OUT), HIDDEN)
    b2 = u(ks[3], (1, OUT), HIDDEN)
    return {"w1": w1.astype(jnp.bfloat16), "b1": b1, "w2": w2, "b2": b2}


# --------------------------- self-test ----------------------------------------

def _reference(x, params):
    # Pure-JAX reference with the same bf16-rounded fc1 operands.
    b = x.shape[0]
    xf = x.reshape(b, -1).astype(jnp.bfloat16).astype(jnp.float32)
    h = jnp.dot(xf, params["w1"].astype(jnp.float32)) + params["b1"]
    h = jnp.tanh(h)
    y = jnp.dot(h, params["w2"]) + params["b2"]
    return jax.nn.log_softmax(y, axis=-1)


if __name__ == "__main__":
    key = jax.random.PRNGKey(0)
    pkey, xkey = jax.random.split(key)
    params = init_params(pkey)
    # MNIST-like input: [B, 1, 28, 28]; view(B, -1) -> [B, 784].
    x = jax.random.normal(xkey, (2, 1, 28, 28), jnp.float32)

    out = jax.jit(netfull_forward)(x, params)
    out = jax.block_until_ready(out)

    assert out.shape == (2, 10), out.shape
    # log_softmax sanity: exp(out) rows sum to 1.
    rowsum = jnp.sum(jnp.exp(out), axis=1)
    assert bool(jnp.all(jnp.abs(rowsum - 1.0) < 1e-4)), rowsum
    # Match the pure-JAX reference.
    ref = _reference(x, params)
    assert bool(jnp.all(jnp.abs(out - ref) < 1e-3)), jnp.max(jnp.abs(out - ref))
    print("KERNEL_OK")
</pallas_src>

<mosaic_0001>
module attributes {stable_mosaic.version = 11 : i64} {
  func.func @_netfull_kernel(%arg0: i32, %arg1: memref<2x784xbf16, #tpu.memory_space<vmem>>, %arg2: memref<784x150xbf16, #tpu.memory_space<vmem>>, %arg3: memref<1x150xf32, #tpu.memory_space<vmem>>, %arg4: memref<150x10xf32, #tpu.memory_space<vmem>>, %arg5: memref<1x10xf32, #tpu.memory_space<vmem>>, %arg6: memref<2x10xf32, #tpu.memory_space<vmem>>) attributes {dimension_semantics = [#tpu.dimension_semantics<parallel>], iteration_bounds = array<i64: 1>, scalar_prefetch = 0 : i64, scratch_operands = 0 : i64, tpu.core_type = #tpu.core_type<tc>, window_params = [{transform_indices = @transform_0, window_bounds = array<i64: 2, 784>}, {pipeline_mode = #tpu.pipeline_mode<synchronous>, transform_indices = @transform_1, window_bounds = array<i64: 784, 150>}, {pipeline_mode = #tpu.pipeline_mode<synchronous>, transform_indices = @transform_2, window_bounds = array<i64: 1, 150>}, {pipeline_mode = #tpu.pipeline_mode<synchronous>, transform_indices = @transform_3, window_bounds = array<i64: 150, 10>}, {pipeline_mode = #tpu.pipeline_mode<synchronous>, transform_indices = @transform_4, window_bounds = array<i64: 1, 10>}, {transform_indices = @transform_5, window_bounds = array<i64: 2, 10>}]} {
    %c0 = arith.constant 0 : index
    %c0_0 = arith.constant 0 : index
    %0 = vector.load %arg1[%c0, %c0_0] : memref<2x784xbf16, #tpu.memory_space<vmem>>, vector<2x784xbf16>
    %c0_1 = arith.constant 0 : index
    %c0_2 = arith.constant 0 : index
    %1 = vector.load %arg2[%c0_1, %c0_2] : memref<784x150xbf16, #tpu.memory_space<vmem>>, vector<784x150xbf16>
    %cst = arith.constant dense<0.000000e+00> : vector<2x150xf32>
    %2 = tpu.matmul %0, %1, %cst {dimension_numbers = #tpu.dot_dimension_numbers<[1], [0], [0], [1], [0, 0, 1, 1], [], []>} : vector<2x784xbf16>, vector<784x150xbf16>, vector<2x150xf32> -> vector<2x150xf32>
    %c0_3 = arith.constant 0 : index
    %c0_4 = arith.constant 0 : index
    %3 = vector.load %arg3[%c0_3, %c0_4] : memref<1x150xf32, #tpu.memory_space<vmem>>, vector<1x150xf32>
    %4 = vector.broadcast %3 : vector<1x150xf32> to vector<2x150xf32>
    %5 = arith.addf %2, %4 : vector<2x150xf32>
    %6 = math.tanh %5 : vector<2x150xf32>
    %c0_5 = arith.constant 0 : index
    %c0_6 = arith.constant 0 : index
    %7 = vector.load %arg4[%c0_5, %c0_6] : memref<150x10xf32, #tpu.memory_space<vmem>>, vector<150x10xf32>
    %cst_7 = arith.constant dense<0.000000e+00> : vector<2x10xf32>
    %8 = tpu.matmul %6, %7, %cst_7 {dimension_numbers = #tpu.dot_dimension_numbers<[1], [0], [0], [1], [0, 0, 1, 1], [], []>} : vector<2x150xf32>, vector<150x10xf32>, vector<2x10xf32> -> vector<2x10xf32>
    %c0_8 = arith.constant 0 : index
    %c0_9 = arith.constant 0 : index
    %9 = vector.load %arg5[%c0_8, %c0_9] : memref<1x10xf32, #tpu.memory_space<vmem>>, vector<1x10xf32>
    %10 = vector.broadcast %9 : vector<1x10xf32> to vector<2x10xf32>
    %11 = arith.addf %8, %10 : vector<2x10xf32>
    %cst_10 = arith.constant dense<0xFF800000> : vector<2xf32>
    %12 = vector.multi_reduction <maximumf>, %11, %cst_10 [1] : vector<2x10xf32> to vector<2xf32>
    %13 = vector.shape_cast %12 : vector<2xf32> to vector<2x1xf32>
    %14 = vector.broadcast %13 : vector<2x1xf32> to vector<2x10xf32>
    %15 = arith.subf %11, %14 : vector<2x10xf32>
    %16 = math.exp %15 : vector<2x10xf32>
    %cst_11 = arith.constant dense<0.000000e+00> : vector<2xf32>
    %17 = vector.multi_reduction <add>, %16, %cst_11 [1] : vector<2x10xf32> to vector<2xf32>
    %18 = vector.shape_cast %17 : vector<2xf32> to vector<2x1xf32>
    %19 = math.log %18 : vector<2x1xf32>
    %20 = vector.broadcast %19 : vector<2x1xf32> to vector<2x10xf32>
    %21 = arith.subf %15, %20 : vector<2x10xf32>
    %c0_12 = arith.constant 0 : index
    %c0_13 = arith.constant 0 : index
    %22 = vector.load %arg6[%c0_12, %c0_13] : memref<2x10xf32, #tpu.memory_space<vmem>>, vector<2x10xf32>
    tpu.vector_store %arg6[%c0_12, %c0_13], %21 {strides = array<i32>} : memref<2x10xf32, #tpu.memory_space<vmem>>, vector<2x10xf32>,
    return
  }
  func.func @transform_0(%arg0: i32) -> (i32, i32) {
    %c0_i32 = arith.constant 0 : i32
    %c0_i32_0 = arith.constant 0 : i32
    return %arg0, %c0_i32 : i32, i32
  }
  func.func @transform_1(%arg0: i32) -> (i32, i32) {
    %c0_i32 = arith.constant 0 : i32
    %c0_i32_0 = arith.constant 0 : i32
    %c0_i32_1 = arith.constant 0 : i32
    return %c0_i32, %c0_i32_0 : i32, i32
  }
  func.func @transform_2(%arg0: i32) -> (i32, i32) {
    %c0_i32 = arith.constant 0 : i32
    %c0_i32_0 = arith.constant 0 : i32
    %c0_i32_1 = arith.constant 0 : i32
    return %c0_i32, %c0_i32_0 : i32, i32
  }
  func.func @transform_3(%arg0: i32) -> (i32, i32) {
    %c0_i32 = arith.constant 0 : i32
    %c0_i32_0 = arith.constant 0 : i32
    %c0_i32_1 = arith.constant 0 : i32
    return %c0_i32, %c0_i32_0 : i32, i32
  }
  func.func @transform_4(%arg0: i32) -> (i32, i32) {
    %c0_i32 = arith.constant 0 : i32
    %c0_i32_0 = arith.constant 0 : i32
    %c0_i32_1 = arith.constant 0 : i32
    return %c0_i32, %c0_i32_0 : i32, i32
  }
  func.func @transform_5(%arg0: i32) -> (i32, i32) {
    %c0_i32 = arith.constant 0 : i32
    %c0_i32_0 = arith.constant 0 : i32
    return %arg0, %c0_i32 : i32, i32
  }
}

</mosaic_0001>

<llo_original>
// kernel: netfull_forward.1
$region0: #{netfull_forward.1}
  #allocation0 [shape = 'u32[]', space=smem, size = 0x4, offset = 0x4, fixed_abs, tag = 'smem constant byte address 0x4 - core index']
  #allocation1 [shape = 'u32[144,128]{1,0:T(1,128)}', space=vmem, size = 0x12000, scoped, tag = 'internal scratch']
  %s0 = inlined_call_operand.vmem [shape: bf16[2,784], index: 0, kind: input, shape index: {}]
  %s1 = inlined_call_operand.vmem [shape: bf16[784,150], index: 1, kind: input, shape index: {}]
  %s2 = inlined_call_operand.vmem [shape: f32[1,150], index: 2, kind: input, shape index: {}]
  %s3 = inlined_call_operand.vmem [shape: f32[150,10], index: 3, kind: input, shape index: {}]
  %s4 = inlined_call_operand.vmem [shape: f32[1,10], index: 4, kind: input, shape index: {}]
  %s5 = inlined_call_operand.hbm [shape: f32[2,10], index: 5, kind: output, shape index: {}]
  %s6 = sld [smem:[#allocation0]]
  $region30: #{netfull_forward.1} parent=0
    _
  %s8 = ssub.s32 1, %s6
  %s9 = scalar_select 0, %s8, %s6
  $region1: #{netfull_forward.1} parent=0
    #allocation2 [shape = 'u8[1024]{0}', space=vmem, size = 0x400, scoped, tag = 'output window, operand 0, single buffered']
    #allocation3 [shape = 's32[1]{0}', space=sflag, size = 0x4, scoped, tag = 'scoped memory for netfull_forward.1']
    %10 = vsyncpa [#allocation3], 0
    // Predicated region
    $region2: #{netfull_forward.1} parent=1 // pred_check
      _
    $region3: #{netfull_forward.1} parent=1 // pred_check_branch
      %12 = sbr.rel (0) target = $region5
    $region4: #{netfull_forward.1} parent=1 // pred_region
      _
    $region5: #{netfull_forward.1} parent=1 // pred_fallthru
      _
    // Predicated region
    $region6: #{netfull_forward.1} parent=1 // pred_check
      _
    $region7: #{netfull_forward.1} parent=1 // pred_check_branch
      %14 = sbr.rel (0) target = $region9
    $region8: #{netfull_forward.1} parent=1 // pred_region
      _
    $region9: #{netfull_forward.1} parent=1 // pred_fallthru
      _
    // Predicated region
    $region10: #{netfull_forward.1} parent=1 // pred_check
      _
    $region11: #{netfull_forward.1} parent=1 // pred_check_branch
      %16 = sbr.rel (0) target = $region13
    $region12: #{netfull_forward.1} parent=1 // pred_region
      _
    $region13: #{netfull_forward.1} parent=1 // pred_fallthru
      _
    // Predicated region
    $region14: #{netfull_forward.1} parent=1 // pred_check
      _
    $region15: #{netfull_forward.1} parent=1 // pred_check_branch
      %18 = sbr.rel (0) target = $region17
    $region16: #{netfull_forward.1} parent=1 // pred_region
      _
    $region17: #{netfull_forward.1} parent=1 // pred_fallthru
      _
    // Predicated region
    $region18: #{netfull_forward.1} parent=1 // pred_check
      _
    $region19: #{netfull_forward.1} parent=1 // pred_check_branch
      %20 = sbr.rel (0) target = $region21
    $region20: #{netfull_forward.1} parent=1 // pred_region
      _
    $region21: #{netfull_forward.1} parent=1 // pred_fallthru
      _
    %v22 = vld [vmem:[%s0] sm:$0x7f]
    %v23 = vld [vmem:[%s1] sm:$0xff]
    %v24 = vld [vmem:[%s1 + $0x8] sm:$0xff]
    %v25 = vld [vmem:[%s1 + $0x10] sm:$0xff]
    %v26 = vld [vmem:[%s1 + $0x18] sm:$0xff]
    %v27 = vld [vmem:[%s1 + $0x20] sm:$0xff]
    %v28 = vld [vmem:[%s1 + $0x28] sm:$0xff]
    %v29 = vld [vmem:[%s1 + $0x30] sm:$0xff]
    %v30 = vld [vmem:[%s1 + $0x38] sm:$0xff]
    %v31 = vld [vmem:[%s1 + $0x40] sm:$0xff]
    %v32 = vld [vmem:[%s1 + $0x48] sm:$0xff]
    %v33 = vld [vmem:[%s1 + $0x50] sm:$0xff]
    %v34 = vld [vmem:[%s1 + $0x58] sm:$0xff]
    %v35 = vld [vmem:[%s1 + $0x60] sm:$0xff]
    %v36 = vld [vmem:[%s1 + $0x68] sm:$0xff]
    %v37 = vld [vmem:[%s1 + $0x70] sm:$0xff]
    %v38 = vld [vmem:[%s1 + $0x78] sm:$0xff]
    %v39 = vld [vmem:[%s1 + $0x80] sm:$0xff]
    %v40 = vld [vmem:[%s1 + $0x88] sm:$0xff]
    %v41 = vld [vmem:[%s1 + $0x90] sm:$0xff]
    %v42 = vld [vmem:[%s1 + $0x98] sm:$0xff]
    %v43 = vld [vmem:[%s1 + $0xa0] sm:$0xff]
    %v44 = vld [vmem:[%s1 + $0xa8] sm:$0xff]
    %v45 = vld [vmem:[%s1 + $0xb0] sm:$0xff]
    %v46 = vld [vmem:[%s1 + $0xb8] sm:$0xff]
    %v47 = vld [vmem:[%s1 + $0xc0] sm:$0xff]
    %v48 = vld [vmem:[%s1 + $0xc8] sm:$0xff]
    %v49 = vld [vmem:[%s1 + $0xd0] sm:$0xff]
    %v50 = vld [vmem:[%s1 + $0xd8] sm:$0xff]
    %v51 = vld [vmem:[%s1 + $0xe0] sm:$0xff]
    %v52 = vld [vmem:[%s1 + $0xe8] sm:$0xff]
    %v53 = vld [vmem:[%s1 + $0xf0] sm:$0xff]
    %v54 = vld [vmem:[%s1 + $0xf8] sm:$0xff]
    %v55 = vld [vmem:[%s1 + $0x100] sm:$0xff]
    %v56 = vld [vmem:[%s1 + $0x108] sm:$0xff]
    %v57 = vld [vmem:[%s1 + $0x110] sm:$0xff]
    %v58 = vld [vmem:[%s1 + $0x118] sm:$0xff]
    %v59 = vld [vmem:[%s1 + $0x120] sm:$0xff]
    %v60 = vld [vmem:[%s1 + $0x128] sm:$0xff]
    %v61 = vld [vmem:[%s1 + $0x130] sm:$0xff]
    %v62 = vld [vmem:[%s1 + $0x138] sm:$0xff]
    %v63 = vld [vmem:[%s1 + $0x140] sm:$0xff]
    %v64 = vld [vmem:[%s1 + $0x148] sm:$0xff]
    %v65 = vld [vmem:[%s1 + $0x150] sm:$0xff]
    %v66 = vld [vmem:[%s1 + $0x158] sm:$0xff]
    %v67 = vld [vmem:[%s1 + $0x160] sm:$0xff]
    %v68 = vld [vmem:[%s1 + $0x168] sm:$0xff]
    %v69 = vld [vmem:[%s1 + $0x170] sm:$0xff]
    %v70 = vld [vmem:[%s1 + $0x178] sm:$0xff]
    %v71 = vld [vmem:[%s1 + $0x180] sm:$0xff]
    %v72 = vld [vmem:[%s1 + $0x188] sm:$0xff]
    %v73 = vld [vmem:[%s1 + $0x190] sm:$0xff]
    %v74 = vld [vmem:[%s1 + $0x198] sm:$0xff]
    %v75 = vld [vmem:[%s1 + $0x1a0] sm:$0xff]
    %v76 = vld [vmem:[%s1 + $0x1a8] sm:$0xff]
    %v77 = vld [vmem:[%s1 + $0x1b0] sm:$0xff]
    %v78 = vld [vmem:[%s1 + $0x1b8] sm:$0xff]
    %v79 = vld [vmem:[%s1 + $0x1c0] sm:$0xff]
    %v80 = vld [vmem:[%s1 + $0x1c8] sm:$0xff]
    %v81 = vld [vmem:[%s1 + $0x1d0] sm:$0xff]
    %v82 = vld [vmem:[%s1 + $0x1d8] sm:$0xff]
    %v83 = vld [vmem:[%s1 + $0x1e0] sm:$0xff]
    %v84 = vld [vmem:[%s1 + $0x1e8] sm:$0xff]
    %v85 = vld [vmem:[%s1 + $0x1f0] sm:$0xff]
    %v86 = vld [vmem:[%s1 + $0x1f8] sm:$0xff]
    %v87 = vld [vmem:[%s1 + $0x200] sm:$0xff]
    %v88 = vld [vmem:[%s1 + $0x208] sm:$0xff]
    %v89 = vld [vmem:[%s1 + $0x210] sm:$0xff]
    %v90 = vld [vmem:[%s1 + $0x218] sm:$0xff]
    %v91 = vld [vmem:[%s1 + $0x220] sm:$0xff]
    %v92 = vld [vmem:[%s1 + $0x228] sm:$0xff]
    %v93 = vld [vmem:[%s1 + $0x230] sm:$0xff]
    %v94 = vld [vmem:[%s1 + $0x238] sm:$0xff]
    %v95 = vld [vmem:[%s1 + $0x240] sm:$0xff]
    %v96 = vld [vmem:[%s1 + $0x248] sm:$0xff]
    %v97 = vld [vmem:[%s1 + $0x250] sm:$0xff]
    %v98 = vld [vmem:[%s1 + $0x258] sm:$0xff]
    %v99 = vld [vmem:[%s1 + $0x260] sm:$0xff]
    %v100 = vld [vmem:[%s1 + $0x268] sm:$0xff]
    %v101 = vld [vmem:[%s1 + $0x270] sm:$0xff]
    %v102 = vld [vmem:[%s1 + $0x278] sm:$0xff]
    %v103 = vld [vmem:[%s1 + $0x280] sm:$0xff]
    %v104 = vld [vmem:[%s1 + $0x288] sm:$0xff]
    %v105 = vld [vmem:[%s1 + $0x290] sm:$0xff]
    %v106 = vld [vmem:[%s1 + $0x298] sm:$0xff]
    %v107 = vld [vmem:[%s1 + $0x2a0] sm:$0xff]
    %v108 = vld [vmem:[%s1 + $0x2a8] sm:$0xff]
    %v109 = vld [vmem:[%s1 + $0x2b0] sm:$0xff]
    %v110 = vld [vmem:[%s1 + $0x2b8] sm:$0xff]
    %v111 = vld [vmem:[%s1 + $0x2c0] sm:$0xff]
    %v112 = vld [vmem:[%s1 + $0x2c8] sm:$0xff]
    %v113 = vld [vmem:[%s1 + $0x2d0] sm:$0xff]
    %v114 = vld [vmem:[%s1 + $0x2d8] sm:$0xff]
    %v115 = vld [vmem:[%s1 + $0x2e0] sm:$0xff]
    %v116 = vld [vmem:[%s1 + $0x2e8] sm:$0xff]
    %v117 = vld [vmem:[%s1 + $0x2f0] sm:$0xff]
    %v118 = vld [vmem:[%s1 + $0x2f8] sm:$0xff]
    %v119 = vld [vmem:[%s1 + $0x300] sm:$0xff]
    %v120 = vld [vmem:[%s1 + $0x308] sm:$0xff]
    %v121 = vld [vmem:[%s2] sm:$0x3]
    %v123 = vlaneseq
    %v124 = vshrl.u32 %v123, 7
    %v125 = vsub.s32 0, %v124
    %v126 = vrot.slane %v121, %v125
    %v127 = vlaneseq
    %v128 = vshrl.u32 %v127, 7
    %v129 = vsub.s32 1, %v128
    %v130 = vrot.slane %v121, %v129
    %v134 = vcombine.high %v22, %v22
    %v136 = vunpack.c.l.s4 1966171168
    %v137 = vunpack.c.0.s8 %v136
    %v138 = vlaneseq
    %v139 = vshrl.u32 %v138, 7
    %v140 = vsub.s32 %v137, %v139
    %v141 = vrot.slane %v22, %v140
    %v143 = vunpack.c.l.s4 1966171168
    %v144 = vunpack.c.0.s8 %v143
    %v145 = vlaneseq
    %v146 = vshrl.u32 %v145, 7
    %v147 = vsub.s32 %v144, %v146
    %v148 = vrot.slane %v134, %v147
    %v149 = vcombine.high %v141, %v141
    %v150 = vcombine.high %v148, %v148
    %v152 = vunpack.c.l.s4 1966171168
    %v153 = vunpack.c.0.s8 %v152
    %v154 = vlaneseq
    %v155 = vshrl.u32 %v154, 7
    %v156 = vsub.s32 %v153, %v155
    %v157 = vrot.slane %v141, %v156
    %v159 = vunpack.c.l.s4 1966171168
    %v160 = vunpack.c.0.s8 %v159
    %v161 = vlaneseq
    %v162 = vshrl.u32 %v161, 7
    %v163 = vsub.s32 %v160, %v162
    %v164 = vrot.slane %v148, %v163
    %v166 = vunpack.c.l.s4 1966171168
    %v167 = vunpack.c.0.s8 %v166
    %v168 = vlaneseq
    %v169 = vshrl.u32 %v168, 7
    %v170 = vsub.s32 %v167, %v169
    %v171 = vrot.slane %v149, %v170
    %v173 = vunpack.c.l.s4 1966171168
    %v174 = vunpack.c.0.s8 %v173
    %v175 = vlaneseq
    %v176 = vshrl.u32 %v175, 7
    %v177 = vsub.s32 %v174, %v176
    %v178 = vrot.slane %v150, %v177
    %v179 = vcombine.high %v157, %v157
    %v180 = vcombine.high %v164, %v164
    %v181 = vcombine.high %v171, %v171
    %v286 = vunpack.c.l.b16 %v23
    %v287 = vunpack.c.h.b16 %v23
    %v288 = vunpack.c.l.b16 %v24
    %v289 = vunpack.c.h.b16 %v24
    %v290 = vunpack.c.l.b16 %v25
    %v291 = vunpack.c.h.b16 %v25
    %v292 = vunpack.c.l.b16 %v26
    %v293 = vunpack.c.h.b16 %v26
    %v294 = vunpack.c.l.b16 %v27
    %v295 = vunpack.c.h.b16 %v27
    %v296 = vunpack.c.l.b16 %v28
    %v297 = vunpack.c.h.b16 %v28
    %v298 = vunpack.c.l.b16 %v29
    %v299 = vunpack.c.h.b16 %v29
    %v300 = vunpack.c.l.b16 %v30
    %v301 = vunpack.c.h.b16 %v30
    %v302 = vunpack.c.l.b16 %v31
    %v303 = vunpack.c.h.b16 %v31
    %v304 = vunpack.c.l.b16 %v32
    %v305 = vunpack.c.h.b16 %v32
    %v306 = vunpack.c.l.b16 %v33
    %v307 = vunpack.c.h.b16 %v33
    %v308 = vunpack.c.l.b16 %v34
    %v309 = vunpack.c.h.b16 %v34
    %v310 = vunpack.c.l.b16 %v35
    %v311 = vunpack.c.h.b16 %v35
    %v312 = vunpack.c.l.b16 %v36
    %v313 = vunpack.c.h.b16 %v36
    %v314 = vunpack.c.l.b16 %v37
    %v315 = vunpack.c.h.b16 %v37
    %v316 = vunpack.c.l.b16 %v38
    %v317 = vunpack.c.h.b16 %v38
    %v318 = vunpack.c.l.b16 %v39
    %v319 = vunpack.c.h.b16 %v39
    %v320 = vunpack.c.l.b16 %v40
    %v321 = vunpack.c.h.b16 %v40
    %v322 = vunpack.c.l.b16 %v41
    %v323 = vunpack.c.h.b16 %v41
    %v324 = vunpack.c.l.b16 %v42
    %v325 = vunpack.c.h.b16 %v42
    %v326 = vunpack.c.l.b16 %v43
    %v327 = vunpack.c.h.b16 %v43
    %v328 = vunpack.c.l.b16 %v44
    %v329 = vunpack.c.h.b16 %v44
    %v330 = vunpack.c.l.b16 %v45
    %v331 = vunpack.c.h.b16 %v45
    %v332 = vunpack.c.l.b16 %v46
    %v333 = vunpack.c.h.b16 %v46
    %v334 = vunpack.c.l.b16 %v47
    %v335 = vunpack.c.h.b16 %v47
    %v336 = vunpack.c.l.b16 %v48
    %v337 = vunpack.c.h.b16 %v48
    %v338 = vunpack.c.l.b16 %v49
    %v339 = vunpack.c.h.b16 %v49
    %v340 = vunpack.c.l.b16 %v50
    %v341 = vunpack.c.h.b16 %v50
    %v342 = vunpack.c.l.b16 %v51
    %v343 = vunpack.c.h.b16 %v51
    %v344 = vunpack.c.l.b16 %v52
    %v345 = vunpack.c.h.b16 %v52
    %v346 = vunpack.c.l.b16 %v53
    %v347 = vunpack.c.h.b16 %v53
    %v348 = vunpack.c.l.b16 %v54
    %v349 = vunpack.c.h.b16 %v54
    %v350 = vunpack.c.l.b16 %v55
    %v351 = vunpack.c.h.b16 %v55
    %v352 = vunpack.c.l.b16 %v56
    %v353 = vunpack.c.h.b16 %v56
    %v354 = vunpack.c.l.b16 %v57
    %v355 = vunpack.c.h.b16 %v57
    %v356 = vunpack.c.l.b16 %v58
    %v357 = vunpack.c.h.b16 %v58
    %v358 = vunpack.c.l.b16 %v59
    %v359 = vunpack.c.h.b16 %v59
    %v360 = vunpack.c.l.b16 %v60
    %v361 = vunpack.c.h.b16 %v60
    %v362 = vunpack.c.l.b16 %v61
    %v363 = vunpack.c.h.b16 %v61
    %v364 = vunpack.c.l.b16 %v62
    %v365 = vunpack.c.h.b16 %v62
    %v366 = vunpack.c.l.b16 %v63
    %v367 = vunpack.c.h.b16 %v63
    %v368 = vunpack.c.l.b16 %v64
    %v369 = vunpack.c.h.b16 %v64
    %v370 = vunpack.c.l.b16 %v65
    %v371 = vunpack.c.h.b16 %v65
    %v372 = vunpack.c.l.b16 %v66
    %v373 = vunpack.c.h.b16 %v66
    %v374 = vunpack.c.l.b16 %v67
    %v375 = vunpack.c.h.b16 %v67
    %v376 = vunpack.c.l.b16 %v68
    %v377 = vunpack.c.h.b16 %v68
    %v378 = vunpack.c.l.b16 %v69
    %v379 = vunpack.c.h.b16 %v69
    %v380 = vunpack.c.l.b16 %v70
    %v381 = vunpack.c.h.b16 %v70
    %v382 = vunpack.c.l.b16 %v71
    %v383 = vunpack.c.h.b16 %v71
    %v384 = vunpack.c.l.b16 %v72
    %v385 = vunpack.c.h.b16 %v72
    %v386 = vunpack.c.l.b16 %v73
    %v387 = vunpack.c.h.b16 %v73
    %v388 = vunpack.c.l.b16 %v74
    %v389 = vunpack.c.h.b16 %v74
    %v390 = vunpack.c.l.b16 %v75
    %v391 = vunpack.c.h.b16 %v75
    %v392 = vunpack.c.l.b16 %v76
    %v393 = vunpack.c.h.b16 %v76
    %v394 = vunpack.c.l.b16 %v77
    %v395 = vunpack.c.h.b16 %v77
    %v396 = vunpack.c.l.b16 %v78
    %v397 = vunpack.c.h.b16 %v78
    %v398 = vunpack.c.l.b16 %v79
    %v399 = vunpack.c.h.b16 %v79
    %v400 = vunpack.c.l.b16 %v80
    %v401 = vunpack.c.h.b16 %v80
    %v402 = vunpack.c.l.b16 %v81
    %v403 = vunpack.c.h.b16 %v81
    %v404 = vunpack.c.l.b16 %v82
    %v405 = vunpack.c.h.b16 %v82
    %v406 = vunpack.c.l.b16 %v83
    %v407 = vunpack.c.h.b16 %v83
    %v408 = vunpack.c.l.b16 %v84
    %v409 = vunpack.c.h.b16 %v84
    %v410 = vunpack.c.l.b16 %v85
    %v411 = vunpack.c.h.b16 %v85
    %v412 = vunpack.c.l.b16 %v86
    %v413 = vunpack.c.h.b16 %v86
    %v414 = vunpack.c.l.b16 %v87
    %v415 = vunpack.c.h.b16 %v87
    %v416 = vunpack.c.l.b16 %v88
    %v417 = vunpack.c.h.b16 %v88
    %v418 = vunpack.c.l.b16 %v89
    %v419 = vunpack.c.h.b16 %v89
    %v420 = vunpack.c.l.b16 %v90
    %v421 = vunpack.c.h.b16 %v90
    %v422 = vunpack.c.l.b16 %v91
    %v423 = vunpack.c.h.b16 %v91
    %v424 = vunpack.c.l.b16 %v92
    %v425 = vunpack.c.h.b16 %v92
    %v426 = vunpack.c.l.b16 %v93
    %v427 = vunpack.c.h.b16 %v93
    %v428 = vunpack.c.l.b16 %v94
    %v429 = vunpack.c.h.b16 %v94
    %v430 = vunpack.c.l.b16 %v95
    %v431 = vunpack.c.h.b16 %v95
    %v432 = vunpack.c.l.b16 %v96
    %v433 = vunpack.c.h.b16 %v96
    %v434 = vunpack.c.l.b16 %v97
    %v435 = vunpack.c.h.b16 %v97
    %v436 = vunpack.c.l.b16 %v98
    %v437 = vunpack.c.h.b16 %v98
    %v438 = vunpack.c.l.b16 %v99
    %v439 = vunpack.c.h.b16 %v99
    %v440 = vunpack.c.l.b16 %v100
    %v441 = vunpack.c.h.b16 %v100
    %v442 = vunpack.c.l.b16 %v101
    %v443 = vunpack.c.h.b16 %v101
    %v444 = vunpack.c.l.b16 %v102
    %v445 = vunpack.c.h.b16 %v102
    %v446 = vunpack.c.l.b16 %v103
    %v447 = vunpack.c.h.b16 %v103
    %v448 = vunpack.c.l.b16 %v104
    %v449 = vunpack.c.h.b16 %v104
    %v450 = vunpack.c.l.b16 %v105
    %v451 = vunpack.c.h.b16 %v105
    %v452 = vunpack.c.l.b16 %v106
    %v453 = vunpack.c.h.b16 %v106
    %v454 = vunpack.c.l.b16 %v107
    %v455 = vunpack.c.h.b16 %v107
    %v456 = vunpack.c.l.b16 %v108
    %v457 = vunpack.c.h.b16 %v108
    %v458 = vunpack.c.l.b16 %v109
    %v459 = vunpack.c.h.b16 %v109
    %v460 = vunpack.c.l.b16 %v110
    %v461 = vunpack.c.h.b16 %v110
    %v462 = vunpack.c.l.b16 %v111
    %v463 = vunpack.c.h.b16 %v111
    %v464 = vunpack.c.l.b16 %v112
    %v465 = vunpack.c.h.b16 %v112
    %v466 = vunpack.c.l.b16 %v113
    %v467 = vunpack.c.h.b16 %v113
    %v468 = vunpack.c.l.b16 %v114
    %v469 = vunpack.c.h.b16 %v114
    %v470 = vunpack.c.l.b16 %v115
    %v471 = vunpack.c.h.b16 %v115
    %v472 = vunpack.c.l.b16 %v116
    %v473 = vunpack.c.h.b16 %v116
    %v474 = vunpack.c.l.b16 %v117
    %v475 = vunpack.c.h.b16 %v117
    %v476 = vunpack.c.l.b16 %v118
    %v477 = vunpack.c.h.b16 %v118
    %v478 = vunpack.c.l.b16 %v119
    %v479 = vunpack.c.h.b16 %v119
    %v480 = vunpack.c.l.b16 %v120
    %v481 = vunpack.c.h.b16 %v120
    %v482 = vpack.c.b16 %v288, %v286
    %v483 = vpack.c.b16 %v289, %v287
    %v484 = vpack.c.b16 %v292, %v290
    %v485 = vpack.c.b16 %v293, %v291
    %v486 = vpack.c.b16 %v296, %v294
    %v487 = vpack.c.b16 %v297, %v295
    %v488 = vpack.c.b16 %v300, %v298
    %v489 = vpack.c.b16 %v301, %v299
    %v490 = vpack.c.b16 %v304, %v302
    %v491 = vpack.c.b16 %v305, %v303
    %v492 = vpack.c.b16 %v308, %v306
    %v493 = vpack.c.b16 %v309, %v307
    %v494 = vpack.c.b16 %v312, %v310
    %v495 = vpack.c.b16 %v313, %v311
    %v496 = vpack.c.b16 %v316, %v314
    %v497 = vpack.c.b16 %v317, %v315
    %v498 = vpack.c.b16 %v320, %v318
    %v499 = vpack.c.b16 %v321, %v319
    %v500 = vpack.c.b16 %v324, %v322
    %v501 = vpack.c.b16 %v325, %v323
    %v502 = vpack.c.b16 %v328, %v326
    %v503 = vpack.c.b16 %v329, %v327
    %v504 = vpack.c.b16 %v332, %v330
    %v505 = vpack.c.b16 %v333, %v331
    %v506 = vpack.c.b16 %v336, %v334
    %v507 = vpack.c.b16 %v337, %v335
    %v508 = vpack.c.b16 %v340, %v338
    %v509 = vpack.c.b16 %v341, %v339
    %v510 = vpack.c.b16 %v344, %v342
    %v511 = vpack.c.b16 %v345, %v343
    %v512 = vpack.c.b16 %v348, %v346
    %v513 = vpack.c.b16 %v349, %v347
    %v514 = vpack.c.b16 %v352, %v350
    %v515 = vpack.c.b16 %v353, %v351
    %v516 = vpack.c.b16 %v356, %v354
    %v517 = vpack.c.b16 %v357, %v355
    %v518 = vpack.c.b16 %v360, %v358
    %v519 = vpack.c.b16 %v361, %v359
    %v520 = vpack.c.b16 %v364, %v362
    %v521 = vpack.c.b16 %v365, %v363
    %v522 = vpack.c.b16 %v368, %v366
    %v523 = vpack.c.b16 %v369, %v367
    %v524 = vpack.c.b16 %v372, %v370
    %v525 = vpack.c.b16 %v373, %v371
    %v526 = vpack.c.b16 %v376, %v374
    %v527 = vpack.c.b16 %v377, %v375
    %v528 = vpack.c.b16 %v380, %v378
    %v529 = vpack.c.b16 %v381, %v379
    %v530 = vpack.c.b16 %v384, %v382
    %v531 = vpack.c.b16 %v385, %v383
    %v532 = vpack.c.b16 %v388, %v386
    %v533 = vpack.c.b16 %v389, %v387
    %v534 = vpack.c.b16 %v392, %v390
    %v535 = vpack.c.b16 %v393, %v391
    %v536 = vpack.c.b16 %v396, %v394
    %v537 = vpack.c.b16 %v397, %v395
    %v538 = vpack.c.b16 %v400, %v398
    %v539 = vpack.c.b16 %v401, %v399
    %v540 = vpack.c.b16 %v404, %v402
    %v541 = vpack.c.b16 %v405, %v403
    %v542 = vpack.c.b16 %v408, %v406
    %v543 = vpack.c.b16 %v409, %v407
    %v544 = vpack.c.b16 %v412, %v410
    %v545 = vpack.c.b16 %v413, %v411
    %v546 = vpack.c.b16 %v416, %v414
    %v547 = vpack.c.b16 %v417, %v415
    %v548 = vpack.c.b16 %v420, %v418
    %v549 = vpack.c.b16 %v421, %v419
    %v550 = vpack.c.b16 %v424, %v422
    %v551 = vpack.c.b16 %v425, %v423
    %v552 = vpack.c.b16 %v428, %v426
    %v553 = vpack.c.b16 %v429, %v427
    %v554 = vpack.c.b16 %v432, %v430
    %v555 = vpack.c.b16 %v433, %v431
    %v556 = vpack.c.b16 %v436, %v434
    %v557 = vpack.c.b16 %v437, %v435
    %v558 = vpack.c.b16 %v440, %v438
    %v559 = vpack.c.b16 %v441, %v439
    %v560 = vpack.c.b16 %v444, %v442
    %v561 = vpack.c.b16 %v445, %v443
    %v562 = vpack.c.b16 %v448, %v446
    %v563 = vpack.c.b16 %v449, %v447
    %v564 = vpack.c.b16 %v452, %v450
    %v565 = vpack.c.b16 %v453, %v451
    %v566 = vpack.c.b16 %v456, %v454
    %v567 = vpack.c.b16 %v457, %v455
    %v568 = vpack.c.b16 %v460, %v458
    %v569 = vpack.c.b16 %v461, %v459
    %v570 = vpack.c.b16 %v464, %v462
    %v571 = vpack.c.b16 %v465, %v463
    %v572 = vpack.c.b16 %v468, %v466
    %v573 = vpack.c.b16 %v469, %v467
    %v574 = vpack.c.b16 %v472, %v470
    %v575 = vpack.c.b16 %v473, %v471
    %v576 = vpack.c.b16 %v476, %v474
    %v577 = vpack.c.b16 %v477, %v475
    %v578 = vpack.c.b16 %v480, %v478
    %v579 = vpack.c.b16 %v481, %v479
    %vm678 = vcmask 130048
    %v680 = vsel %vm678, %v180, 0
    %682 = vmatprep.subr.bf16.mxu0 %v483
    %683 = vmatpush1.bf16.msra.mxu0 %v482
    %684 = vmatprep.subr.bf16.mxu0 %v485
    %685 = vmatpush1.bf16.msra.mxu0 %v484
    %686 = vmatprep.subr.bf16.mxu0 %v487
    %687 = vmatpush1.bf16.msra.mxu0 %v486
    %688 = vmatprep.subr.bf16.mxu0 %v489
    %689 = vmatpush1.bf16.msra.mxu0 %v488
    %690 = vmatprep.subr.bf16.mxu0 %v491
    %691 = vmatpush1.bf16.msra.mxu0 %v490
    %692 = vmatprep.subr.bf16.mxu0 %v493
    %693 = vmatpush1.bf16.msra.mxu0 %v492
    %694 = vmatprep.subr.bf16.mxu0 %v495
    %695 = vmatpush1.bf16.msra.mxu0 %v494
    %696 = vmatprep.subr.bf16.mxu0 %v497
    %697 = vmatpush1.bf16.msra.mxu0 %v496
    %698 = vmatprep.subr.bf16.mxu0 %v499
    %699 = vmatpush1.bf16.msra.mxu0 %v498
    %700 = vmatprep.subr.bf16.mxu0 %v501
    %701 = vmatpush1.bf16.msra.mxu0 %v500
    %702 = vmatprep.subr.bf16.mxu0 %v503
    %703 = vmatpush1.bf16.msra.mxu0 %v502
    %704 = vmatprep.subr.bf16.mxu0 %v505
    %705 = vmatpush1.bf16.msra.mxu0 %v504
    %706 = vmatprep.subr.bf16.mxu0 %v507
    %707 = vmatpush1.bf16.msra.mxu0 %v506
    %708 = vmatprep.subr.bf16.mxu0 %v509
    %709 = vmatpush1.bf16.msra.mxu0 %v508
    %710 = vmatprep.subr.bf16.mxu0 %v511
    %711 = vmatpush1.bf16.msra.mxu0 %v510
    %712 = vmatprep.subr.bf16.mxu0 %v513
    %713 = vmatpush1.bf16.msra.mxu0 %v512
    %714 = vmatprep.mubr.bf16.mxu0 %v171
    %715 = vmatmul.mubr.bf16.gmra.mrb[0].mxu0 %v157
    %v716 = vpop.f32.mrb[0].mxu0
    %v717 = vadd.f32 %v126, %v716
    %v718 = vpop.f32.mrb[0].mxu0
    %v719 = vadd.f32 %v130, %v718
    %v720 = vpop.f32.mrb[0].mxu0
    %v721 = vpop.f32.mrb[0].mxu0
    %722 = vdwg.mxu0
    %723 = vmatprep.subr.bf16.mxu0 %v515
    %724 = vmatpush1.bf16.msra.mxu0 %v514
    %725 = vmatprep.subr.bf16.mxu0 %v517
    %726 = vmatpush1.bf16.msra.mxu0 %v516
    %727 = vmatprep.subr.bf16.mxu0 %v519
    %728 = vmatpush1.bf16.msra.mxu0 %v518
    %729 = vmatprep.subr.bf16.mxu0 %v521
    %730 = vmatpush1.bf16.msra.mxu0 %v520
    %731 = vmatprep.subr.bf16.mxu0 %v523
    %732 = vmatpush1.bf16.msra.mxu0 %v522
    %733 = vmatprep.subr.bf16.mxu0 %v525
    %734 = vmatpush1.bf16.msra.mxu0 %v524
    %735 = vmatprep.subr.bf16.mxu0 %v527
    %736 = vmatpush1.bf16.msra.mxu0 %v526
    %737 = vmatprep.subr.bf16.mxu0 %v529
    %738 = vmatpush1.bf16.msra.mxu0 %v528
    %739 = vmatprep.subr.bf16.mxu0 %v531
    %740 = vmatpush1.bf16.msra.mxu0 %v530
    %741 = vmatprep.subr.bf16.mxu0 %v533
    %742 = vmatpush1.bf16.msra.mxu0 %v532
    %743 = vmatprep.subr.bf16.mxu0 %v535
    %744 = vmatpush1.bf16.msra.mxu0 %v534
    %745 = vmatprep.subr.bf16.mxu0 %v537
    %746 = vmatpush1.bf16.msra.mxu0 %v536
    %747 = vmatprep.subr.bf16.mxu0 %v539
    %748 = vmatpush1.bf16.msra.mxu0 %v538
    %749 = vmatprep.subr.bf16.mxu0 %v541
    %750 = vmatpush1.bf16.msra.mxu0 %v540
    %751 = vmatprep.subr.bf16.mxu0 %v543
    %752 = vmatpush1.bf16.msra.mxu0 %v542
    %753 = vmatprep.subr.bf16.mxu0 %v545
    %754 = vmatpush1.bf16.msra.mxu0 %v544
    %755 = vmatprep.mubr.bf16.mxu0 %v181
    %756 = vmatmul.mubr.bf16.gmra.mrb[0].mxu0 %v179
    %v757 = vpop.f32.mrb[0].mxu0
    %v758 = vadd.f32 %v717, %v757
    %v759 = vpop.f32.mrb[0].mxu0
    %v760 = vadd.f32 %v719, %v759
    %v761 = vpop.f32.mrb[0].mxu0
    %v762 = vpop.f32.mrb[0].mxu0
    %763 = vdwg.mxu0
    %764 = vmatprep.subr.bf16.mxu0 %v547
    %765 = vmatpush1.bf16.msra.mxu0 %v546
    %766 = vmatprep.subr.bf16.mxu0 %v549
    %767 = vmatpush1.bf16.msra.mxu0 %v548
    %768 = vmatprep.subr.bf16.mxu0 %v551
    %769 = vmatpush1.bf16.msra.mxu0 %v550
    %770 = vmatprep.subr.bf16.mxu0 %v553
    %771 = vmatpush1.bf16.msra.mxu0 %v552
    %772 = vmatprep.subr.bf16.mxu0 %v555
    %773 = vmatpush1.bf16.msra.mxu0 %v554
    %774 = vmatprep.subr.bf16.mxu0 %v557
    %775 = vmatpush1.bf16.msra.mxu0 %v556
    %776 = vmatprep.subr.bf16.mxu0 %v559
    %777 = vmatpush1.bf16.msra.mxu0 %v558
    %778 = vmatprep.subr.bf16.mxu0 %v561
    %779 = vmatpush1.bf16.msra.mxu0 %v560
    %780 = vmatprep.subr.bf16.mxu0 %v563
    %781 = vmatpush1.bf16.msra.mxu0 %v562
    %782 = vmatprep.subr.bf16.mxu0 %v565
    %783 = vmatpush1.bf16.msra.mxu0 %v564
    %784 = vmatprep.subr.bf16.mxu0 %v567
    %785 = vmatpush1.bf16.msra.mxu0 %v566
    %786 = vmatprep.subr.bf16.mxu0 %v569
    %787 = vmatpush1.bf16.msra.mxu0 %v568
    %788 = vmatprep.subr.bf16.mxu0 %v571
    %789 = vmatpush1.bf16.msra.mxu0 %v570
    %790 = vmatprep.subr.bf16.mxu0 %v573
    %791 = vmatpush1.bf16.msra.mxu0 %v572
    %792 = vmatprep.subr.bf16.mxu0 %v575
    %793 = vmatpush1.bf16.msra.mxu0 %v574
    %794 = vmatprep.subr.bf16.mxu0 %v577
    %795 = vmatpush1.bf16.msra.mxu0 %v576
    %796 = vmatprep.mubr.bf16.mxu0 %v178
    %797 = vmatmul.mubr.bf16.gmra.mrb[0].mxu0 %v164
    %v798 = vpop.f32.mrb[0].mxu0
    %v799 = vadd.f32 %v758, %v798
    %v800 = vpop.f32.mrb[0].mxu0
    %v801 = vadd.f32 %v760, %v800
    %v802 = vpop.f32.mrb[0].mxu0
    %v803 = vpop.f32.mrb[0].mxu0
    %804 = vdwg.mxu0
    %805 = vmatprep.subr.bf16.mxu0 %v579
    %806 = vmatpush1.bf16.msra.mxu0 %v578
    %807 = vmatprep.subr.bf16.mxu0 0
    %808 = vmatpush1.bf16.msra.mxu0 0
    %809 = vmatprep.subr.bf16.mxu0 0
    %810 = vmatpush1.bf16.msra.mxu0 0
    %811 = vmatprep.subr.bf16.mxu0 0
    %812 = vmatpush1.bf16.msra.mxu0 0
    %813 = vmatprep.subr.bf16.mxu0 0
    %814 = vmatpush1.bf16.msra.mxu0 0
    %815 = vmatprep.subr.bf16.mxu0 0
    %816 = vmatpush1.bf16.msra.mxu0 0
    %817 = vmatprep.subr.bf16.mxu0 0
    %818 = vmatpush1.bf16.msra.mxu0 0
    %819 = vmatprep.subr.bf16.mxu0 0
    %820 = vmatpush1.bf16.msra.mxu0 0
    %821 = vmatprep.subr.bf16.mxu0 0
    %822 = vmatpush1.bf16.msra.mxu0 0
    %823 = vmatprep.subr.bf16.mxu0 0
    %824 = vmatpush1.bf16.msra.mxu0 0
    %825 = vmatprep.subr.bf16.mxu0 0
    %826 = vmatpush1.bf16.msra.mxu0 0
    %827 = vmatprep.subr.bf16.mxu0 0
    %828 = vmatpush1.bf16.msra.mxu0 0
    %829 = vmatprep.subr.bf16.mxu0 0
    %830 = vmatpush1.bf16.msra.mxu0 0
    %831 = vmatprep.subr.bf16.mxu0 0
    %832 = vmatpush1.bf16.msra.mxu0 0
    %833 = vmatprep.subr.bf16.mxu0 0
    %834 = vmatpush1.bf16.msra.mxu0 0
    %835 = vmatprep.subr.bf16.mxu0 0
    %836 = vmatpush1.bf16.msra.mxu0 0
    %837 = vmatprep.mubr.bf16.mxu0 0
    %838 = vmatmul.mubr.bf16.gmra.mrb[0].mxu0 %v680
    %v839 = vpop.f32.mrb[0].mxu0
    %v840 = vadd.f32 %v799, %v839
    %v841 = vpop.f32.mrb[0].mxu0
    %v842 = vadd.f32 %v801, %v841
    %v843 = vpop.f32.mrb[0].mxu0
    %v844 = vpop.f32.mrb[0].mxu0
    %845 = vdwg.mxu0
    %v846 = vtanh.pop %v840
    %v847 = vtanh.pop %v842
    %v848 = vld [vmem:[%s3] sm:$0xff]
    %v849 = vld [vmem:[%s3 + $0x8] sm:$0xff]
    %v850 = vld [vmem:[%s3 + $0x10] sm:$0xff]
    %v851 = vld [vmem:[%s3 + $0x18] sm:$0xff]
    %v852 = vld [vmem:[%s3 + $0x20] sm:$0xff]
    %v853 = vld [vmem:[%s3 + $0x28] sm:$0xff]
    %v854 = vld [vmem:[%s3 + $0x30] sm:$0xff]
    %v855 = vld [vmem:[%s3 + $0x38] sm:$0xff]
    %v856 = vld [vmem:[%s3 + $0x40] sm:$0xff]
    %v857 = vld [vmem:[%s3 + $0x48] sm:$0xff]
    %v858 = vld [vmem:[%s3 + $0x50] sm:$0xff]
    %v859 = vld [vmem:[%s3 + $0x58] sm:$0xff]
    %v860 = vld [vmem:[%s3 + $0x60] sm:$0xff]
    %v861 = vld [vmem:[%s3 + $0x68] sm:$0xff]
    %v862 = vld [vmem:[%s3 + $0x70] sm:$0xff]
    %v863 = vld [vmem:[%s3 + $0x78] sm:$0xff]
    %v864 = vld [vmem:[%s3 + $0x80] sm:$0xff]
    %v865 = vld [vmem:[%s3 + $0x88] sm:$0xff]
    %v866 = vld [vmem:[%s3 + $0x90] sm:$0x3f]
    %v867 = vld [vmem:[%s4] sm:$0x1]
    %v869 = vlaneseq
    %v870 = vshrl.u32 %v869, 7
    %v871 = vsub.s32 0, %v870
    %v872 = vrot.slane %v867, %v871
    %vm874 = vcmask 179200
    %v876 = vsel %vm874, %v847, 0
    %vm878 = vcmask 1045504
    %v880 = vsel %vm878, %v866, 0
    %882 = vmatprep.subr.mxu0 0.0
    %883 = vmatpush1.msra.mxu0 %v848
    %884 = vmatprep.subr.mxu0 0.0
    %885 = vmatpush1.msra.mxu0 %v849
    %886 = vmatprep.subr.mxu0 0.0
    %887 = vmatpush1.msra.mxu0 %v850
    %888 = vmatprep.subr.mxu0 0.0
    %889 = vmatpush1.msra.mxu0 %v851
    %890 = vmatprep.subr.mxu0 0.0
    %891 = vmatpush1.msra.mxu0 %v852
    %892 = vmatprep.subr.mxu0 0.0
    %893 = vmatpush1.msra.mxu0 %v853
    %894 = vmatprep.subr.mxu0 0.0
    %895 = vmatpush1.msra.mxu0 %v854
    %896 = vmatprep.subr.mxu0 0.0
    %897 = vmatpush1.msra.mxu0 %v855
    %898 = vmatprep.subr.mxu0 0.0
    %899 = vmatpush1.msra.mxu0 %v856
    %900 = vmatprep.subr.mxu0 0.0
    %901 = vmatpush1.msra.mxu0 %v857
    %902 = vmatprep.subr.mxu0 0.0
    %903 = vmatpush1.msra.mxu0 %v858
    %904 = vmatprep.subr.mxu0 0.0
    %905 = vmatpush1.msra.mxu0 %v859
    %906 = vmatprep.subr.mxu0 0.0
    %907 = vmatpush1.msra.mxu0 %v860
    %908 = vmatprep.subr.mxu0 0.0
    %909 = vmatpush1.msra.mxu0 %v861
    %910 = vmatprep.subr.mxu0 0.0
    %911 = vmatpush1.msra.mxu0 %v862
    %912 = vmatprep.subr.mxu0 0.0
    %913 = vmatpush1.msra.mxu0 %v863
    %914 = vmatprep.subr.mxu0 0.0
    %915 = vmatpush1.msra.mxu0 %v864
    %916 = vmatprep.subr.mxu0 0.0
    %917 = vmatpush1.msra.mxu0 %v865
    %918 = vmatprep.subr.mxu0 0.0
    %919 = vmatpush1.msra.mxu0 %v880
    %920 = vmatprep.subr.mxu0 0.0
    %921 = vmatpush1.msra.mxu0 0.0
    %922 = vmatprep.subr.mxu0 0.0
    %923 = vmatpush1.msra.mxu0 0.0
    %924 = vmatprep.subr.mxu0 0.0
    %925 = vmatpush1.msra.mxu0 0.0
    %926 = vmatprep.subr.mxu0 0.0
    %927 = vmatpush1.msra.mxu0 0.0
    %928 = vmatprep.subr.mxu0 0.0
    %929 = vmatpush1.msra.mxu0 0.0
    %930 = vmatprep.subr.mxu0 0.0
    %931 = vmatpush1.msra.mxu0 0.0
    %932 = vmatprep.subr.mxu0 0.0
    %933 = vmatpush1.msra.mxu0 0.0
    %934 = vmatprep.subr.mxu0 0.0
    %935 = vmatpush1.msra.mxu0 0.0
    %936 = vmatprep.subr.mxu0 0.0
    %937 = vmatpush1.msra.mxu0 0.0
    %938 = vmatprep.subr.mxu0 0.0
    %939 = vmatpush1.msra.mxu0 0.0
    %940 = vmatprep.subr.mxu0 0.0
    %941 = vmatpush1.msra.mxu0 0.0
    %942 = vmatprep.subr.mxu0 0.0
    %943 = vmatpush1.msra.mxu0 0.0
    %944 = vmatprep.subr.mxu0 0.0
    %945 = vmatpush1.msra.mxu0 0.0
    %946 = vmatprep.mubr.f32.mxu0 %v876
    %947 = vmatmul.mubr.f32.gmra.mrb[0].mxu0 %v846
    %v948 = vpop.f32.mrb[0].mxu0
    %v949 = vadd.f32 %v872, %v948
    %v950 = vpop.f32.mrb[0].mxu0
    %951 = vdwg.mxu0
    %vm952 = vcmask 74752
    %v953 = vsel %vm952, %v949, -inf
    %954 = vmax.xlane.f32.xlu0 %v953
    %v955 = vpop.xlane.xlu0 %954
    %v956 = vsub.f32 %v949, %v955
    %v957 = vmul.f32 %v956, 1.442695
    %v958 = vpow.pop %v957
    %v959 = vsel %vm952, %v958, 0.0
    %960 = vadd.xlane.f32.xlu0 %v959
    %v961 = vpop.xlane.xlu0 %960
    %v962 = vlog2.pop %v961
    %v963 = vmul.f32 %v962, 0.6931472
    %v964 = vsub.f32 %v956, %v963
    %965 = vst.msk [vmem:[#allocation2] sm:$0x3] %vm952, %v964
    // Predicated region
    $region22: #{netfull_forward.1} parent=1 // pred_check
      _
    $region23: #{netfull_forward.1} parent=1 // pred_check_branch
      %967 = sbr.rel (0) target = $region25
    $region24: #{netfull_forward.1} parent=1 // pred_region
      %s969 = ssub.s32 32, 32
      %970 = vsyncadd [#allocation3], %s969
      %s972 = sshll.u32 [#allocation2], 4
      %s973 = int_to_ptr.vmem [resolvable:$true] %s972
      %975 = dma.vmem_to_hbm [thread:$0]  %s973, 32, %s5, [#allocation3]
    $region25: #{netfull_forward.1} parent=1 // pred_fallthru
      _
    // Predicated region
    $region26: #{netfull_forward.1} parent=1 // pred_check
      _
    $region27: #{netfull_forward.1} parent=1 // pred_check_branch
      %977 = sbr.rel (0) target = $region29
    $region28: #{netfull_forward.1} parent=1 // pred_region
      %978 = dma.done [#allocation3], 32
    $region29: #{netfull_forward.1} parent=1 // pred_fallthru
      _
    %979 = vsyncpa [#allocation3], 1

</llo_original>
